<compile_context>
chip_gen: v6e
topology: v6e:2x2x1
jax: 0.10.0
libtpu: 0.0.40
codegen_flags: <defaults>
</compile_context>

<pallas_src>
import functools
import math

import jax
import jax.numpy as jnp
from jax.experimental import pallas as pl
from jax.experimental.pallas import tpu as pltpu

HIDDEN_SIZE = 48
INPUT_SIZE = 28
NUM_CLASSES = 10

# Padded, tile-aligned kernel geometry.
BP = 8          # batch padded to one sublane tile
HP = 128        # hidden / input / class dims padded to one lane tile

# Row offsets inside the packed parameter buffer (all multiples of 8).
_OFF_WR = 0             # rows [  0,128): w_r^T   (H x H valid)
_OFF_PR = HP            # rows [128,256): p_r^T   (I x H valid)
_OFF_VEC = 2 * HP       # rows [256,264): row0=b_r, row1=g_z, row2=b_fc, row3=dt
_OFF_WFC = 2 * HP + 8   # rows [264,392): w_fc^T  (H x C valid)
_PK_ROWS = _OFF_WFC + HP


def rnn_kernel(x2d_ref, pk_ref, out_ref, *, seq_len):
    """Single-invocation kernel: full recurrence + FC head.

    x2d_ref : (T*BP, HP)  time-major, batch/lane padded input
              (row t*BP + b, cols [0:I) == x[b, t, :], rest zero)
    pk_ref  : (_PK_ROWS, HP) packed parameters (layout: _OFF_* above)
    out_ref : (BP, HP)    rows [0:B), cols [0:C) hold the FC output
    """
    # --- prologue: gate constants (computed exactly once) ---------------------
    vec = pk_ref[_OFF_VEC:_OFF_VEC + 8, :]          # (8, HP), one vreg
    b_r = vec[0:1, :]                               # (1, HP)
    g_z = vec[1:2, :]                               # (1, HP)
    b_fc = vec[2:3, :]                              # (1, HP)
    dt = vec[3:4, :]                                # (1, HP), dt broadcast row

    z = jnp.clip(dt, 0.0, 1.0) * jax.nn.sigmoid(g_z)        # (1, HP)
    z_b = jnp.broadcast_to(z, (BP, HP))                      # hoisted broadcast

    # Input projection for ALL time steps in one MXU pass:
    #   xp[t*BP + b, :] = x[b, t, :] @ p_r^T + b_r     (padded cols stay 0)
    xp = (jnp.dot(x2d_ref[...], pk_ref[_OFF_PR:_OFF_PR + HP, :],
                  preferred_element_type=jnp.float32)
          + b_r)                                             # (T*BP, HP)

    # --- serial recurrence: h carried in registers, fully unrolled ------------
    w_rT = pk_ref[_OFF_WR:_OFF_WR + HP, :]                   # (HP, HP)
    h = jnp.zeros((BP, HP), jnp.float32)
    for t in range(seq_len):                                 # T is static & small
        xp_t = xp[t * BP:(t + 1) * BP, :]                    # aligned (8,128) view
        pre = jnp.dot(h, w_rT, preferred_element_type=jnp.float32) + xp_t
        h = h + z_b * (jnp.tanh(pre) - h)                    # fused gate update

    # --- FC head (lane-dense (8,128) store) ------------------------------------
    out_ref[...] = (jnp.dot(h, pk_ref[_OFF_WFC:_OFF_WFC + HP, :],
                            preferred_element_type=jnp.float32)
                    + jnp.broadcast_to(b_fc, (BP, HP)))


def rnn_forward(x, params):
    """x: (B, T, I) float32 ; returns (B, num_classes) float32."""
    B, T, I = x.shape
    H = params["w_r"].shape[0]
    C = params["w_fc"].shape[0]
    assert B <= BP and H <= HP and I <= HP and C <= HP

    f32 = jnp.float32

    # Glue (done once, outside the kernel): pad + pack.
    # x: (B,T,I) -> time-major (T,B,I) -> zero-pad to (T,BP,HP) -> (T*BP, HP).
    xt = jnp.transpose(x, (1, 0, 2)).astype(f32)
    x2d = (jnp.zeros((T, BP, HP), f32)
           .at[:, :B, :I].set(xt)
           .reshape(T * BP, HP))

    # One packed parameter buffer (single DMA into VMEM).
    pk = jnp.zeros((_PK_ROWS, HP), f32)
    pk = pk.at[_OFF_WR:_OFF_WR + H, :H].set(params["w_r"].T.astype(f32))
    pk = pk.at[_OFF_PR:_OFF_PR + I, :H].set(params["p_r"].T.astype(f32))
    pk = pk.at[_OFF_VEC + 0, :H].set(params["b_r"].reshape(H).astype(f32))
    pk = pk.at[_OFF_VEC + 1, :H].set(params["g_z"].reshape(H).astype(f32))
    pk = pk.at[_OFF_VEC + 2, :C].set(params["b_fc"].reshape(C).astype(f32))
    pk = pk.at[_OFF_VEC + 3, :].set(
        jnp.broadcast_to(params["dt"].astype(f32).reshape(()), (HP,)))
    pk = pk.at[_OFF_WFC:_OFF_WFC + H, :C].set(params["w_fc"].T.astype(f32))

    kernel = functools.partial(rnn_kernel, seq_len=T)
    vmem = pl.BlockSpec(memory_space=pltpu.MemorySpace.VMEM)

    out_pad = pl.pallas_call(
        kernel,
        out_shape=jax.ShapeDtypeStruct((BP, HP), f32),
        in_specs=[vmem, vmem],   # x2d, packed params
        out_specs=vmem,
    )(x2d, pk)

    return out_pad[:B, :C]


def init_params(key, hidden_size=HIDDEN_SIZE, input_size=INPUT_SIZE,
                num_classes=NUM_CLASSES):
    """Deterministic init matching the module's uniform(-1/sqrt(H), 1/sqrt(H)).

    dt is fixed to a positive value so the clamp(dt,0,1) gate is nonzero and the
    recurrence is actually exercised by the numerical check (the forward pass
    clamps it to [0,1] regardless, so semantics are unchanged).
    """
    bound = 1.0 / math.sqrt(hidden_size)
    ks = jax.random.split(key, 7)
    u = lambda k, shape: jax.random.uniform(
        k, shape, jnp.float32, minval=-bound, maxval=bound)
    return {
        "w_r": u(ks[0], (hidden_size, hidden_size)),
        "p_r": u(ks[1], (hidden_size, input_size)),
        "b_r": u(ks[2], (hidden_size, 1)),
        "g_z": u(ks[3], (hidden_size, 1)),
        "dt": jnp.array([0.05], jnp.float32),
        "w_fc": u(ks[5], (num_classes, hidden_size)),
        "b_fc": u(ks[6], (num_classes,)),
    }


def rnn_forward_ref(x, params):
    """Pure-JAX reference of the PyTorch forward, for verification."""
    B, T, I = x.shape
    H = params["w_r"].shape[0]
    h = jnp.zeros((B, H), jnp.float32)
    z = jnp.clip(params["dt"][0], 0.0, 1.0) * jax.nn.sigmoid(
        params["g_z"].reshape(1, H))
    for t in range(T):
        x_t = x[:, t, :]
        pre = h @ params["w_r"].T + x_t @ params["p_r"].T + params["b_r"].reshape(1, H)
        h = (1.0 - z) * h + z * jnp.tanh(pre)
    return h @ params["w_fc"].T + params["b_fc"].reshape(1, -1)


if __name__ == "__main__":
    key = jax.random.PRNGKey(0)
    k_param, k_x = jax.random.split(key)

    B, T, I = 2, 8, INPUT_SIZE            # batch=2, seq=8, input_size=28
    params = init_params(k_param)
    x = jax.random.normal(k_x, (B, T, I), dtype=jnp.float32)

    out = rnn_forward(x, params)
    out = jax.block_until_ready(out)

    ref = rnn_forward_ref(x, params)
    assert out.shape == (B, NUM_CLASSES)
    assert jnp.allclose(out, ref, atol=1e-3, rtol=1e-3), (out, ref)

    print("KERNEL_OK")
</pallas_src>

<mosaic_0001>
module attributes {stable_mosaic.version = 11 : i64} {
  func.func @rnn_kernel(%arg0: memref<64x128xf32, #tpu.memory_space<vmem>>, %arg1: memref<392x128xf32, #tpu.memory_space<vmem>>, %arg2: memref<8x128xf32, #tpu.memory_space<vmem>>) attributes {dimension_semantics = [], scalar_prefetch = 0 : i64, scratch_operands = 0 : i64, tpu.core_type = #tpu.core_type<tc>} {
    %c256 = arith.constant 256 : index
    %c0 = arith.constant 0 : index
    %0 = vector.load %arg1[%c256, %c0] : memref<392x128xf32, #tpu.memory_space<vmem>>, vector<8x128xf32>
    %1 = vector.extract_strided_slice %0 {offsets = [0, 0], sizes = [1, 128], strides = [1, 1]} : vector<8x128xf32> to vector<1x128xf32>
    %2 = vector.extract_strided_slice %0 {offsets = [1, 0], sizes = [1, 128], strides = [1, 1]} : vector<8x128xf32> to vector<1x128xf32>
    %3 = vector.extract_strided_slice %0 {offsets = [2, 0], sizes = [1, 128], strides = [1, 1]} : vector<8x128xf32> to vector<1x128xf32>
    %4 = vector.extract_strided_slice %0 {offsets = [3, 0], sizes = [1, 128], strides = [1, 1]} : vector<8x128xf32> to vector<1x128xf32>
    %cst = arith.constant 0.000000e+00 : f32
    %cst_0 = arith.constant 1.000000e+00 : f32
    %5 = vector.broadcast %cst : f32 to vector<1x128xf32>
    %6 = arith.maximumf %5, %4 : vector<1x128xf32>
    %7 = vector.broadcast %cst_0 : f32 to vector<1x128xf32>
    %8 = arith.minimumf %7, %6 : vector<1x128xf32>
    %9 = arith.negf %2 : vector<1x128xf32>
    %10 = math.exp %9 : vector<1x128xf32>
    %cst_1 = arith.constant 1.000000e+00 : f32
    %11 = vector.broadcast %cst_1 : f32 to vector<1x128xf32>
    %12 = arith.addf %11, %10 : vector<1x128xf32>
    %13 = arith.divf %11, %12 : vector<1x128xf32>
    %14 = arith.mulf %8, %13 : vector<1x128xf32>
    %15 = vector.shape_cast %14 : vector<1x128xf32> to vector<1x128xf32>
    %16 = vector.broadcast %15 : vector<1x128xf32> to vector<8x128xf32>
    %c0_2 = arith.constant 0 : index
    %c0_3 = arith.constant 0 : index
    %17 = vector.load %arg0[%c0_2, %c0_3] : memref<64x128xf32, #tpu.memory_space<vmem>>, vector<64x128xf32>
    %c128 = arith.constant 128 : index
    %c0_4 = arith.constant 0 : index
    %18 = vector.load %arg1[%c128, %c0_4] : memref<392x128xf32, #tpu.memory_space<vmem>>, vector<128x128xf32>
    %cst_5 = arith.constant dense<0.000000e+00> : vector<64x128xf32>
    %19 = tpu.matmul %17, %18, %cst_5 {dimension_numbers = #tpu.dot_dimension_numbers<[1], [0], [0], [1], [0, 0, 1, 1], [], []>} : vector<64x128xf32>, vector<128x128xf32>, vector<64x128xf32> -> vector<64x128xf32>
    %20 = vector.broadcast %1 : vector<1x128xf32> to vector<64x128xf32>
    %21 = arith.addf %19, %20 : vector<64x128xf32>
    %c0_6 = arith.constant 0 : index
    %c0_7 = arith.constant 0 : index
    %22 = vector.load %arg1[%c0_6, %c0_7] : memref<392x128xf32, #tpu.memory_space<vmem>>, vector<128x128xf32>
    %cst_8 = arith.constant 0.000000e+00 : f32
    %23 = vector.broadcast %cst_8 : f32 to vector<8x128xf32>
    %24 = vector.extract_strided_slice %21 {offsets = [0, 0], sizes = [8, 128], strides = [1, 1]} : vector<64x128xf32> to vector<8x128xf32>
    %cst_9 = arith.constant dense<0.000000e+00> : vector<8x128xf32>
    %25 = tpu.matmul %23, %22, %cst_9 {dimension_numbers = #tpu.dot_dimension_numbers<[1], [0], [0], [1], [0, 0, 1, 1], [], []>} : vector<8x128xf32>, vector<128x128xf32>, vector<8x128xf32> -> vector<8x128xf32>
    %26 = arith.addf %25, %24 : vector<8x128xf32>
    %27 = math.tanh %26 : vector<8x128xf32>
    %28 = arith.subf %27, %23 : vector<8x128xf32>
    %29 = arith.mulf %16, %28 : vector<8x128xf32>
    %30 = arith.addf %23, %29 : vector<8x128xf32>
    %31 = vector.extract_strided_slice %21 {offsets = [8, 0], sizes = [8, 128], strides = [1, 1]} : vector<64x128xf32> to vector<8x128xf32>
    %cst_10 = arith.constant dense<0.000000e+00> : vector<8x128xf32>
    %32 = tpu.matmul %30, %22, %cst_10 {dimension_numbers = #tpu.dot_dimension_numbers<[1], [0], [0], [1], [0, 0, 1, 1], [], []>} : vector<8x128xf32>, vector<128x128xf32>, vector<8x128xf32> -> vector<8x128xf32>
    %33 = arith.addf %32, %31 : vector<8x128xf32>
    %34 = math.tanh %33 : vector<8x128xf32>
    %35 = arith.subf %34, %30 : vector<8x128xf32>
    %36 = arith.mulf %16, %35 : vector<8x128xf32>
    %37 = arith.addf %30, %36 : vector<8x128xf32>
    %38 = vector.extract_strided_slice %21 {offsets = [16, 0], sizes = [8, 128], strides = [1, 1]} : vector<64x128xf32> to vector<8x128xf32>
    %cst_11 = arith.constant dense<0.000000e+00> : vector<8x128xf32>
    %39 = tpu.matmul %37, %22, %cst_11 {dimension_numbers = #tpu.dot_dimension_numbers<[1], [0], [0], [1], [0, 0, 1, 1], [], []>} : vector<8x128xf32>, vector<128x128xf32>, vector<8x128xf32> -> vector<8x128xf32>
    %40 = arith.addf %39, %38 : vector<8x128xf32>
    %41 = math.tanh %40 : vector<8x128xf32>
    %42 = arith.subf %41, %37 : vector<8x128xf32>
    %43 = arith.mulf %16, %42 : vector<8x128xf32>
    %44 = arith.addf %37, %43 : vector<8x128xf32>
    %45 = vector.extract_strided_slice %21 {offsets = [24, 0], sizes = [8, 128], strides = [1, 1]} : vector<64x128xf32> to vector<8x128xf32>
    %cst_12 = arith.constant dense<0.000000e+00> : vector<8x128xf32>
    %46 = tpu.matmul %44, %22, %cst_12 {dimension_numbers = #tpu.dot_dimension_numbers<[1], [0], [0], [1], [0, 0, 1, 1], [], []>} : vector<8x128xf32>, vector<128x128xf32>, vector<8x128xf32> -> vector<8x128xf32>
    %47 = arith.addf %46, %45 : vector<8x128xf32>
    %48 = math.tanh %47 : vector<8x128xf32>
    %49 = arith.subf %48, %44 : vector<8x128xf32>
    %50 = arith.mulf %16, %49 : vector<8x128xf32>
    %51 = arith.addf %44, %50 : vector<8x128xf32>
    %52 = vector.extract_strided_slice %21 {offsets = [32, 0], sizes = [8, 128], strides = [1, 1]} : vector<64x128xf32> to vector<8x128xf32>
    %cst_13 = arith.constant dense<0.000000e+00> : vector<8x128xf32>
    %53 = tpu.matmul %51, %22, %cst_13 {dimension_numbers = #tpu.dot_dimension_numbers<[1], [0], [0], [1], [0, 0, 1, 1], [], []>} : vector<8x128xf32>, vector<128x128xf32>, vector<8x128xf32> -> vector<8x128xf32>
    %54 = arith.addf %53, %52 : vector<8x128xf32>
    %55 = math.tanh %54 : vector<8x128xf32>
    %56 = arith.subf %55, %51 : vector<8x128xf32>
    %57 = arith.mulf %16, %56 : vector<8x128xf32>
    %58 = arith.addf %51, %57 : vector<8x128xf32>
    %59 = vector.extract_strided_slice %21 {offsets = [40, 0], sizes = [8, 128], strides = [1, 1]} : vector<64x128xf32> to vector<8x128xf32>
    %cst_14 = arith.constant dense<0.000000e+00> : vector<8x128xf32>
    %60 = tpu.matmul %58, %22, %cst_14 {dimension_numbers = #tpu.dot_dimension_numbers<[1], [0], [0], [1], [0, 0, 1, 1], [], []>} : vector<8x128xf32>, vector<128x128xf32>, vector<8x128xf32> -> vector<8x128xf32>
    %61 = arith.addf %60, %59 : vector<8x128xf32>
    %62 = math.tanh %61 : vector<8x128xf32>
    %63 = arith.subf %62, %58 : vector<8x128xf32>
    %64 = arith.mulf %16, %63 : vector<8x128xf32>
    %65 = arith.addf %58, %64 : vector<8x128xf32>
    %66 = vector.extract_strided_slice %21 {offsets = [48, 0], sizes = [8, 128], strides = [1, 1]} : vector<64x128xf32> to vector<8x128xf32>
    %cst_15 = arith.constant dense<0.000000e+00> : vector<8x128xf32>
    %67 = tpu.matmul %65, %22, %cst_15 {dimension_numbers = #tpu.dot_dimension_numbers<[1], [0], [0], [1], [0, 0, 1, 1], [], []>} : vector<8x128xf32>, vector<128x128xf32>, vector<8x128xf32> -> vector<8x128xf32>
    %68 = arith.addf %67, %66 : vector<8x128xf32>
    %69 = math.tanh %68 : vector<8x128xf32>
    %70 = arith.subf %69, %65 : vector<8x128xf32>
    %71 = arith.mulf %16, %70 : vector<8x128xf32>
    %72 = arith.addf %65, %71 : vector<8x128xf32>
    %73 = vector.extract_strided_slice %21 {offsets = [56, 0], sizes = [8, 128], strides = [1, 1]} : vector<64x128xf32> to vector<8x128xf32>
    %cst_16 = arith.constant dense<0.000000e+00> : vector<8x128xf32>
    %74 = tpu.matmul %72, %22, %cst_16 {dimension_numbers = #tpu.dot_dimension_numbers<[1], [0], [0], [1], [0, 0, 1, 1], [], []>} : vector<8x128xf32>, vector<128x128xf32>, vector<8x128xf32> -> vector<8x128xf32>
    %75 = arith.addf %74, %73 : vector<8x128xf32>
    %76 = math.tanh %75 : vector<8x128xf32>
    %77 = arith.subf %76, %72 : vector<8x128xf32>
    %78 = arith.mulf %16, %77 : vector<8x128xf32>
    %79 = arith.addf %72, %78 : vector<8x128xf32>
    %c264 = arith.constant 264 : index
    %c0_17 = arith.constant 0 : index
    %80 = vector.load %arg1[%c264, %c0_17] : memref<392x128xf32, #tpu.memory_space<vmem>>, vector<128x128xf32>
    %cst_18 = arith.constant dense<0.000000e+00> : vector<8x128xf32>
    %81 = tpu.matmul %79, %80, %cst_18 {dimension_numbers = #tpu.dot_dimension_numbers<[1], [0], [0], [1], [0, 0, 1, 1], [], []>} : vector<8x128xf32>, vector<128x128xf32>, vector<8x128xf32> -> vector<8x128xf32>
    %82 = vector.shape_cast %3 : vector<1x128xf32> to vector<1x128xf32>
    %83 = vector.broadcast %82 : vector<1x128xf32> to vector<8x128xf32>
    %84 = arith.addf %81, %83 : vector<8x128xf32>
    %c0_19 = arith.constant 0 : index
    %c0_20 = arith.constant 0 : index
    %85 = vector.load %arg2[%c0_19, %c0_20] : memref<8x128xf32, #tpu.memory_space<vmem>>, vector<8x128xf32>
    tpu.vector_store %arg2[%c0_19, %c0_20], %84 {strides = array<i32>} : memref<8x128xf32, #tpu.memory_space<vmem>>, vector<8x128xf32>,
    return
  }
}

</mosaic_0001>

<llo_original>
// kernel: tpu_custom_call.1
$region0: #{tpu_custom_call.1}
  #allocation0 [shape = 'u32[]', space=smem, size = 0x4, offset = 0x4, fixed_abs, tag = 'smem constant byte address 0x4 - core index']
  #allocation1 [shape = 'u32[144,128]{1,0:T(1,128)}', space=vmem, size = 0x12000, scoped, tag = 'internal scratch']
  %s0 = inlined_call_operand.hbm [shape: f32[64,128], index: 0, kind: input, shape index: {}]
  %s1 = inlined_call_operand.hbm [shape: f32[392,128], index: 1, kind: input, shape index: {}]
  %s2 = inlined_call_operand.hbm [shape: f32[8,128], index: 2, kind: output, shape index: {}]
  %s3 = sld [smem:[#allocation0]]
  $region26: #{tpu_custom_call.1} parent=0
    _
  %s5 = ssub.s32 1, %s3
  %s6 = scalar_select 0, %s5, %s3
  $region1: #{tpu_custom_call.1} parent=0
    #allocation2 [shape = 'u8[32768]{0}', space=vmem, size = 0x8000, scoped, tag = 'input window, operand 0, single buffered']
    #allocation3 [shape = 's32[1]{0}', space=sflag, size = 0x4, scoped, tag = 'scoped memory for tpu_custom_call.1']
    #allocation4 [shape = 's32[1]{0}', space=sflag, size = 0x4, scoped, tag = 'scoped memory for tpu_custom_call.1']
    #allocation5 [shape = 'u8[200704]{0}', space=vmem, size = 0x31000, scoped, tag = 'input window, operand 1, single buffered']
    #allocation6 [shape = 's32[1]{0}', space=sflag, size = 0x4, scoped, tag = 'scoped memory for tpu_custom_call.1']
    #allocation7 [shape = 'u8[4096]{0}', space=vmem, size = 0x1000, scoped, tag = 'output window, operand 0, single buffered']
    %7 = vsyncpa [#allocation3], 0
    %8 = vsyncpa [#allocation6], 0
    %9 = vsyncpa [#allocation4], 0
    // Predicated region
    $region2: #{tpu_custom_call.1} parent=1 // pred_check
      _
    $region3: #{tpu_custom_call.1} parent=1 // pred_check_branch
      %11 = sbr.rel (0) target = $region5
    $region4: #{tpu_custom_call.1} parent=1 // pred_region
      %s13 = ssub.s32 1024, 1024
      %14 = vsyncadd [#allocation3], %s13
      %s15 = sshll.u32 [#allocation2], 4
      %s16 = int_to_ptr.vmem [resolvable:$true] %s15
      %21 = dma.hbm_to_vmem [thread:$0]  %s0, 1024, %s16, [#allocation3], 128, 128, 8
    $region5: #{tpu_custom_call.1} parent=1 // pred_fallthru
      _
    // Predicated region
    $region6: #{tpu_custom_call.1} parent=1 // pred_check
      _
    $region7: #{tpu_custom_call.1} parent=1 // pred_check_branch
      %23 = sbr.rel (0) target = $region9
    $region8: #{tpu_custom_call.1} parent=1 // pred_region
      %s25 = ssub.s32 6272, 6272
      %26 = vsyncadd [#allocation6], %s25
      %s27 = sshll.u32 [#allocation5], 4
      %s28 = int_to_ptr.vmem [resolvable:$true] %s27
      %33 = dma.hbm_to_vmem [thread:$0]  %s1, 6272, %s28, [#allocation6], 128, 128, 8
    $region9: #{tpu_custom_call.1} parent=1 // pred_fallthru
      _
    // Predicated region
    $region10: #{tpu_custom_call.1} parent=1 // pred_check
      _
    $region11: #{tpu_custom_call.1} parent=1 // pred_check_branch
      %35 = sbr.rel (0) target = $region13
    $region12: #{tpu_custom_call.1} parent=1 // pred_region
      %36 = dma.done [#allocation3], 1024
    $region13: #{tpu_custom_call.1} parent=1 // pred_fallthru
      _
    // Predicated region
    $region14: #{tpu_custom_call.1} parent=1 // pred_check
      _
    $region15: #{tpu_custom_call.1} parent=1 // pred_check_branch
      %38 = sbr.rel (0) target = $region17
    $region16: #{tpu_custom_call.1} parent=1 // pred_region
      %39 = dma.done [#allocation6], 6272
    $region17: #{tpu_custom_call.1} parent=1 // pred_fallthru
      _
    %v40 = vld [vmem:[#allocation5 + $0x100] sm:$0xff]
    %v41 = vmax.f32 %v40, 0.0
    %v42 = vmin.f32 %v41, 1.0
    %v43 = vxor.u32 %v40, 2147483648
    %v44 = vmul.f32 %v43, 1.442695
    %v45 = vpow.pop %v44
    %v46 = vadd.f32 %v45, 1.0
    %v47 = vrcp.pop %v46
    %v48 = vmul.f32 1.0, %v47
    %v50 = vrot.slane %v48, 6
    %v52 = vmul.f32 %v42, %v50
    %v53 = vlaneseq
    %v54 = vshrl.u32 %v53, 7
    %v55 = vsub.s32 3, %v54
    %v56 = vrot.slane %v52, %v55
    %v57 = vld [vmem:[#allocation2] sm:$0xff]
    %v58 = vld [vmem:[#allocation2 + $0x8] sm:$0xff]
    %v59 = vld [vmem:[#allocation2 + $0x10] sm:$0xff]
    %v60 = vld [vmem:[#allocation2 + $0x18] sm:$0xff]
    %v61 = vld [vmem:[#allocation2 + $0x20] sm:$0xff]
    %v62 = vld [vmem:[#allocation2 + $0x28] sm:$0xff]
    %v63 = vld [vmem:[#allocation2 + $0x30] sm:$0xff]
    %v64 = vld [vmem:[#allocation2 + $0x38] sm:$0xff]
    %v65 = vld [vmem:[#allocation5 + $0x80] sm:$0xff]
    %v66 = vld [vmem:[#allocation5 + $0x88] sm:$0xff]
    %v67 = vld [vmem:[#allocation5 + $0x90] sm:$0xff]
    %v68 = vld [vmem:[#allocation5 + $0x98] sm:$0xff]
    %v69 = vld [vmem:[#allocation5 + $0xa0] sm:$0xff]
    %v70 = vld [vmem:[#allocation5 + $0xa8] sm:$0xff]
    %v71 = vld [vmem:[#allocation5 + $0xb0] sm:$0xff]
    %v72 = vld [vmem:[#allocation5 + $0xb8] sm:$0xff]
    %v73 = vld [vmem:[#allocation5 + $0xc0] sm:$0xff]
    %v74 = vld [vmem:[#allocation5 + $0xc8] sm:$0xff]
    %v75 = vld [vmem:[#allocation5 + $0xd0] sm:$0xff]
    %v76 = vld [vmem:[#allocation5 + $0xd8] sm:$0xff]
    %v77 = vld [vmem:[#allocation5 + $0xe0] sm:$0xff]
    %v78 = vld [vmem:[#allocation5 + $0xe8] sm:$0xff]
    %v79 = vld [vmem:[#allocation5 + $0xf0] sm:$0xff]
    %v80 = vld [vmem:[#allocation5 + $0xf8] sm:$0xff]
    %v81 = vlaneseq
    %v82 = vshrl.u32 %v81, 7
    %v83 = vsub.s32 0, %v82
    %v84 = vrot.slane %v40, %v83
    %85 = vmatprep.subr.mxu0 0.0
    %86 = vmatpush1.msra.mxu0 %v80
    %87 = vmatprep.subr.mxu0 0.0
    %88 = vmatpush1.msra.mxu0 %v79
    %89 = vmatprep.subr.mxu0 0.0
    %90 = vmatpush1.msra.mxu0 %v78
    %91 = vmatprep.subr.mxu0 0.0
    %92 = vmatpush1.msra.mxu0 %v77
    %93 = vmatprep.subr.mxu0 0.0
    %94 = vmatpush1.msra.mxu0 %v76
    %95 = vmatprep.subr.mxu0 0.0
    %96 = vmatpush1.msra.mxu0 %v75
    %97 = vmatprep.subr.mxu0 0.0
    %98 = vmatpush1.msra.mxu0 %v74
    %99 = vmatprep.subr.mxu0 0.0
    %100 = vmatpush1.msra.mxu0 %v73
    %101 = vmatprep.subr.mxu0 0.0
    %102 = vmatpush1.msra.mxu0 %v72
    %103 = vmatprep.subr.mxu0 0.0
    %104 = vmatpush1.msra.mxu0 %v71
    %105 = vmatprep.subr.mxu0 0.0
    %106 = vmatpush1.msra.mxu0 %v70
    %107 = vmatprep.subr.mxu0 0.0
    %108 = vmatpush1.msra.mxu0 %v69
    %109 = vmatprep.subr.mxu0 0.0
    %110 = vmatpush1.msra.mxu0 %v68
    %111 = vmatprep.subr.mxu0 0.0
    %112 = vmatpush1.msra.mxu0 %v67
    %113 = vmatprep.subr.mxu0 0.0
    %114 = vmatpush1.msra.mxu0 %v66
    %115 = vmatprep.subr.mxu0 0.0
    %116 = vmatpush1.msra.mxu0 %v65
    %117 = vmatprep.subr.mxu0 0.0
    %118 = vmatpush2.msra.mxu0 0.0
    %119 = vmatprep.subr.mxu0 0.0
    %120 = vmatpush2.msra.mxu0 0.0
    %121 = vmatprep.subr.mxu0 0.0
    %122 = vmatpush2.msra.mxu0 0.0
    %123 = vmatprep.subr.mxu0 0.0
    %124 = vmatpush2.msra.mxu0 0.0
    %125 = vmatprep.subr.mxu0 0.0
    %126 = vmatpush2.msra.mxu0 0.0
    %127 = vmatprep.subr.mxu0 0.0
    %128 = vmatpush2.msra.mxu0 0.0
    %129 = vmatprep.subr.mxu0 0.0
    %130 = vmatpush2.msra.mxu0 0.0
    %131 = vmatprep.subr.mxu0 0.0
    %132 = vmatpush2.msra.mxu0 0.0
    %133 = vmatprep.subr.mxu0 0.0
    %134 = vmatpush2.msra.mxu0 0.0
    %135 = vmatprep.subr.mxu0 0.0
    %136 = vmatpush2.msra.mxu0 0.0
    %137 = vmatprep.subr.mxu0 0.0
    %138 = vmatpush2.msra.mxu0 0.0
    %139 = vmatprep.subr.mxu0 0.0
    %140 = vmatpush2.msra.mxu0 0.0
    %141 = vmatprep.subr.mxu0 0.0
    %142 = vmatpush2.msra.mxu0 0.0
    %143 = vmatprep.subr.mxu0 0.0
    %144 = vmatpush2.msra.mxu0 0.0
    %145 = vmatprep.subr.mxu0 0.0
    %146 = vmatpush2.msra.mxu0 0.0
    %147 = vmatprep.subr.mxu0 0.0
    %148 = vmatpush2.msra.mxu0 0.0
    %149 = vmatprep.mubr.f32.mxu0 0.0
    %150 = vmatmul.mubr.f32.gmra.mxu0 %v57
    %v151 = vpop.f32.mrf.mxu0
    %v152 = vadd.f32 %v84, %v151
    %v153 = vpop.f32.mrf.mxu0
    %154 = vmatprep.mubr.f32.mxu0 0.0
    %155 = vmatmul.mubr.f32.gmra.mxu0 %v58
    %v156 = vpop.f32.mrf.mxu0
    %v157 = vadd.f32 %v84, %v156
    %v158 = vpop.f32.mrf.mxu0
    %159 = vmatprep.mubr.f32.mxu0 0.0
    %160 = vmatmul.mubr.f32.gmra.mxu0 %v59
    %v161 = vpop.f32.mrf.mxu0
    %v162 = vadd.f32 %v84, %v161
    %v163 = vpop.f32.mrf.mxu0
    %164 = vmatprep.mubr.f32.mxu0 0.0
    %165 = vmatmul.mubr.f32.gmra.mxu0 %v60
    %v166 = vpop.f32.mrf.mxu0
    %v167 = vadd.f32 %v84, %v166
    %v168 = vpop.f32.mrf.mxu0
    %169 = vmatprep.mubr.f32.mxu0 0.0
    %170 = vmatmul.mubr.f32.gmra.mxu0 %v61
    %v171 = vpop.f32.mrf.mxu0
    %v172 = vadd.f32 %v84, %v171
    %v173 = vpop.f32.mrf.mxu0
    %174 = vmatprep.mubr.f32.mxu0 0.0
    %175 = vmatmul.mubr.f32.gmra.mxu0 %v62
    %v176 = vpop.f32.mrf.mxu0
    %v177 = vadd.f32 %v84, %v176
    %v178 = vpop.f32.mrf.mxu0
    %179 = vmatprep.mubr.f32.mxu0 0.0
    %180 = vmatmul.mubr.f32.gmra.mxu0 %v63
    %v181 = vpop.f32.mrf.mxu0
    %v182 = vadd.f32 %v84, %v181
    %v183 = vpop.f32.mrf.mxu0
    %184 = vmatprep.mubr.f32.mxu0 0.0
    %185 = vmatmul.mubr.f32.gmra.mxu0 %v64
    %v186 = vpop.f32.mrf.mxu0
    %v187 = vadd.f32 %v84, %v186
    %v188 = vpop.f32.mrf.mxu0
    %189 = vdwg.mxu0
    %v190 = vld [vmem:[#allocation5] sm:$0xff]
    %v191 = vld [vmem:[#allocation5 + $0x8] sm:$0xff]
    %v192 = vld [vmem:[#allocation5 + $0x10] sm:$0xff]
    %v193 = vld [vmem:[#allocation5 + $0x18] sm:$0xff]
    %v194 = vld [vmem:[#allocation5 + $0x20] sm:$0xff]
    %v195 = vld [vmem:[#allocation5 + $0x28] sm:$0xff]
    %v196 = vld [vmem:[#allocation5 + $0x30] sm:$0xff]
    %v197 = vld [vmem:[#allocation5 + $0x38] sm:$0xff]
    %v198 = vld [vmem:[#allocation5 + $0x40] sm:$0xff]
    %v199 = vld [vmem:[#allocation5 + $0x48] sm:$0xff]
    %v200 = vld [vmem:[#allocation5 + $0x50] sm:$0xff]
    %v201 = vld [vmem:[#allocation5 + $0x58] sm:$0xff]
    %v202 = vld [vmem:[#allocation5 + $0x60] sm:$0xff]
    %v203 = vld [vmem:[#allocation5 + $0x68] sm:$0xff]
    %v204 = vld [vmem:[#allocation5 + $0x70] sm:$0xff]
    %v205 = vld [vmem:[#allocation5 + $0x78] sm:$0xff]
    %206 = vmatprep.subr.mxu0 0.0
    %207 = vmatpush1.msra.mxu0 %v205
    %208 = vmatprep.subr.mxu0 0.0
    %209 = vmatpush1.msra.mxu0 %v204
    %210 = vmatprep.subr.mxu0 0.0
    %211 = vmatpush1.msra.mxu0 %v203
    %212 = vmatprep.subr.mxu0 0.0
    %213 = vmatpush1.msra.mxu0 %v202
    %214 = vmatprep.subr.mxu0 0.0
    %215 = vmatpush1.msra.mxu0 %v201
    %216 = vmatprep.subr.mxu0 0.0
    %217 = vmatpush1.msra.mxu0 %v200
    %218 = vmatprep.subr.mxu0 0.0
    %219 = vmatpush1.msra.mxu0 %v199
    %220 = vmatprep.subr.mxu0 0.0
    %221 = vmatpush1.msra.mxu0 %v198
    %222 = vmatprep.subr.mxu0 0.0
    %223 = vmatpush1.msra.mxu0 %v197
    %224 = vmatprep.subr.mxu0 0.0
    %225 = vmatpush1.msra.mxu0 %v196
    %226 = vmatprep.subr.mxu0 0.0
    %227 = vmatpush1.msra.mxu0 %v195
    %228 = vmatprep.subr.mxu0 0.0
    %229 = vmatpush1.msra.mxu0 %v194
    %230 = vmatprep.subr.mxu0 0.0
    %231 = vmatpush1.msra.mxu0 %v193
    %232 = vmatprep.subr.mxu0 0.0
    %233 = vmatpush1.msra.mxu0 %v192
    %234 = vmatprep.subr.mxu0 0.0
    %235 = vmatpush1.msra.mxu0 %v191
    %236 = vmatprep.subr.mxu0 0.0
    %237 = vmatpush1.msra.mxu0 %v190
    %238 = vmatprep.subr.mxu0 0.0
    %239 = vmatpush2.msra.mxu0 0.0
    %240 = vmatprep.subr.mxu0 0.0
    %241 = vmatpush2.msra.mxu0 0.0
    %242 = vmatprep.subr.mxu0 0.0
    %243 = vmatpush2.msra.mxu0 0.0
    %244 = vmatprep.subr.mxu0 0.0
    %245 = vmatpush2.msra.mxu0 0.0
    %246 = vmatprep.subr.mxu0 0.0
    %247 = vmatpush2.msra.mxu0 0.0
    %248 = vmatprep.subr.mxu0 0.0
    %249 = vmatpush2.msra.mxu0 0.0
    %250 = vmatprep.subr.mxu0 0.0
    %251 = vmatpush2.msra.mxu0 0.0
    %252 = vmatprep.subr.mxu0 0.0
    %253 = vmatpush2.msra.mxu0 0.0
    %254 = vmatprep.subr.mxu0 0.0
    %255 = vmatpush2.msra.mxu0 0.0
    %256 = vmatprep.subr.mxu0 0.0
    %257 = vmatpush2.msra.mxu0 0.0
    %258 = vmatprep.subr.mxu0 0.0
    %259 = vmatpush2.msra.mxu0 0.0
    %260 = vmatprep.subr.mxu0 0.0
    %261 = vmatpush2.msra.mxu0 0.0
    %262 = vmatprep.subr.mxu0 0.0
    %263 = vmatpush2.msra.mxu0 0.0
    %264 = vmatprep.subr.mxu0 0.0
    %265 = vmatpush2.msra.mxu0 0.0
    %266 = vmatprep.subr.mxu0 0.0
    %267 = vmatpush2.msra.mxu0 0.0
    %268 = vmatprep.subr.mxu0 0.0
    %269 = vmatpush2.msra.mxu0 0.0
    %270 = vmatprep.mubr.f32.mxu0 0.0
    %271 = vmatmul.mubr.f32.gmra.mxu0 0.0
    %v272 = vpop.f32.mrf.mxu0
    %v273 = vadd.f32 %v152, %v272
    %v274 = vpop.f32.mrf.mxu0
    %275 = vdwg.mxu0
    %v276 = vtanh.pop %v273
    %v277 = vmul.f32 %v56, %v276
    %v278 = vadd.f32 %v277, 0.0
    %279 = vmatprep.subr.mxu0 0.0
    %280 = vmatpush1.msra.mxu0 %v205
    %281 = vmatprep.subr.mxu0 0.0
    %282 = vmatpush1.msra.mxu0 %v204
    %283 = vmatprep.subr.mxu0 0.0
    %284 = vmatpush1.msra.mxu0 %v203
    %285 = vmatprep.subr.mxu0 0.0
    %286 = vmatpush1.msra.mxu0 %v202
    %287 = vmatprep.subr.mxu0 0.0
    %288 = vmatpush1.msra.mxu0 %v201
    %289 = vmatprep.subr.mxu0 0.0
    %290 = vmatpush1.msra.mxu0 %v200
    %291 = vmatprep.subr.mxu0 0.0
    %292 = vmatpush1.msra.mxu0 %v199
    %293 = vmatprep.subr.mxu0 0.0
    %294 = vmatpush1.msra.mxu0 %v198
    %295 = vmatprep.subr.mxu0 0.0
    %296 = vmatpush1.msra.mxu0 %v197
    %297 = vmatprep.subr.mxu0 0.0
    %298 = vmatpush1.msra.mxu0 %v196
    %299 = vmatprep.subr.mxu0 0.0
    %300 = vmatpush1.msra.mxu0 %v195
    %301 = vmatprep.subr.mxu0 0.0
    %302 = vmatpush1.msra.mxu0 %v194
    %303 = vmatprep.subr.mxu0 0.0
    %304 = vmatpush1.msra.mxu0 %v193
    %305 = vmatprep.subr.mxu0 0.0
    %306 = vmatpush1.msra.mxu0 %v192
    %307 = vmatprep.subr.mxu0 0.0
    %308 = vmatpush1.msra.mxu0 %v191
    %309 = vmatprep.subr.mxu0 0.0
    %310 = vmatpush1.msra.mxu0 %v190
    %311 = vmatprep.subr.mxu0 0.0
    %312 = vmatpush2.msra.mxu0 0.0
    %313 = vmatprep.subr.mxu0 0.0
    %314 = vmatpush2.msra.mxu0 0.0
    %315 = vmatprep.subr.mxu0 0.0
    %316 = vmatpush2.msra.mxu0 0.0
    %317 = vmatprep.subr.mxu0 0.0
    %318 = vmatpush2.msra.mxu0 0.0
    %319 = vmatprep.subr.mxu0 0.0
    %320 = vmatpush2.msra.mxu0 0.0
    %321 = vmatprep.subr.mxu0 0.0
    %322 = vmatpush2.msra.mxu0 0.0
    %323 = vmatprep.subr.mxu0 0.0
    %324 = vmatpush2.msra.mxu0 0.0
    %325 = vmatprep.subr.mxu0 0.0
    %326 = vmatpush2.msra.mxu0 0.0
    %327 = vmatprep.subr.mxu0 0.0
    %328 = vmatpush2.msra.mxu0 0.0
    %329 = vmatprep.subr.mxu0 0.0
    %330 = vmatpush2.msra.mxu0 0.0
    %331 = vmatprep.subr.mxu0 0.0
    %332 = vmatpush2.msra.mxu0 0.0
    %333 = vmatprep.subr.mxu0 0.0
    %334 = vmatpush2.msra.mxu0 0.0
    %335 = vmatprep.subr.mxu0 0.0
    %336 = vmatpush2.msra.mxu0 0.0
    %337 = vmatprep.subr.mxu0 0.0
    %338 = vmatpush2.msra.mxu0 0.0
    %339 = vmatprep.subr.mxu0 0.0
    %340 = vmatpush2.msra.mxu0 0.0
    %341 = vmatprep.subr.mxu0 0.0
    %342 = vmatpush2.msra.mxu0 0.0
    %343 = vmatprep.mubr.f32.mxu0 0.0
    %344 = vmatmul.mubr.f32.gmra.mxu0 %v278
    %v345 = vpop.f32.mrf.mxu0
    %v346 = vadd.f32 %v157, %v345
    %v347 = vpop.f32.mrf.mxu0
    %348 = vdwg.mxu0
    %v349 = vtanh.pop %v346
    %v350 = vsub.f32 %v349, %v278
    %v351 = vmul.f32 %v56, %v350
    %v352 = vadd.f32 %v278, %v351
    %353 = vmatprep.subr.mxu0 0.0
    %354 = vmatpush1.msra.mxu0 %v205
    %355 = vmatprep.subr.mxu0 0.0
    %356 = vmatpush1.msra.mxu0 %v204
    %357 = vmatprep.subr.mxu0 0.0
    %358 = vmatpush1.msra.mxu0 %v203
    %359 = vmatprep.subr.mxu0 0.0
    %360 = vmatpush1.msra.mxu0 %v202
    %361 = vmatprep.subr.mxu0 0.0
    %362 = vmatpush1.msra.mxu0 %v201
    %363 = vmatprep.subr.mxu0 0.0
    %364 = vmatpush1.msra.mxu0 %v200
    %365 = vmatprep.subr.mxu0 0.0
    %366 = vmatpush1.msra.mxu0 %v199
    %367 = vmatprep.subr.mxu0 0.0
    %368 = vmatpush1.msra.mxu0 %v198
    %369 = vmatprep.subr.mxu0 0.0
    %370 = vmatpush1.msra.mxu0 %v197
    %371 = vmatprep.subr.mxu0 0.0
    %372 = vmatpush1.msra.mxu0 %v196
    %373 = vmatprep.subr.mxu0 0.0
    %374 = vmatpush1.msra.mxu0 %v195
    %375 = vmatprep.subr.mxu0 0.0
    %376 = vmatpush1.msra.mxu0 %v194
    %377 = vmatprep.subr.mxu0 0.0
    %378 = vmatpush1.msra.mxu0 %v193
    %379 = vmatprep.subr.mxu0 0.0
    %380 = vmatpush1.msra.mxu0 %v192
    %381 = vmatprep.subr.mxu0 0.0
    %382 = vmatpush1.msra.mxu0 %v191
    %383 = vmatprep.subr.mxu0 0.0
    %384 = vmatpush1.msra.mxu0 %v190
    %385 = vmatprep.subr.mxu0 0.0
    %386 = vmatpush2.msra.mxu0 0.0
    %387 = vmatprep.subr.mxu0 0.0
    %388 = vmatpush2.msra.mxu0 0.0
    %389 = vmatprep.subr.mxu0 0.0
    %390 = vmatpush2.msra.mxu0 0.0
    %391 = vmatprep.subr.mxu0 0.0
    %392 = vmatpush2.msra.mxu0 0.0
    %393 = vmatprep.subr.mxu0 0.0
    %394 = vmatpush2.msra.mxu0 0.0
    %395 = vmatprep.subr.mxu0 0.0
    %396 = vmatpush2.msra.mxu0 0.0
    %397 = vmatprep.subr.mxu0 0.0
    %398 = vmatpush2.msra.mxu0 0.0
    %399 = vmatprep.subr.mxu0 0.0
    %400 = vmatpush2.msra.mxu0 0.0
    %401 = vmatprep.subr.mxu0 0.0
    %402 = vmatpush2.msra.mxu0 0.0
    %403 = vmatprep.subr.mxu0 0.0
    %404 = vmatpush2.msra.mxu0 0.0
    %405 = vmatprep.subr.mxu0 0.0
    %406 = vmatpush2.msra.mxu0 0.0
    %407 = vmatprep.subr.mxu0 0.0
    %408 = vmatpush2.msra.mxu0 0.0
    %409 = vmatprep.subr.mxu0 0.0
    %410 = vmatpush2.msra.mxu0 0.0
    %411 = vmatprep.subr.mxu0 0.0
    %412 = vmatpush2.msra.mxu0 0.0
    %413 = vmatprep.subr.mxu0 0.0
    %414 = vmatpush2.msra.mxu0 0.0
    %415 = vmatprep.subr.mxu0 0.0
    %416 = vmatpush2.msra.mxu0 0.0
    %417 = vmatprep.mubr.f32.mxu0 0.0
    %418 = vmatmul.mubr.f32.gmra.mxu0 %v352
    %v419 = vpop.f32.mrf.mxu0
    %v420 = vadd.f32 %v162, %v419
    %v421 = vpop.f32.mrf.mxu0
    %422 = vdwg.mxu0
    %v423 = vtanh.pop %v420
    %v424 = vsub.f32 %v423, %v352
    %v425 = vmul.f32 %v56, %v424
    %v426 = vadd.f32 %v352, %v425
    %427 = vmatprep.subr.mxu0 0.0
    %428 = vmatpush1.msra.mxu0 %v205
    %429 = vmatprep.subr.mxu0 0.0
    %430 = vmatpush1.msra.mxu0 %v204
    %431 = vmatprep.subr.mxu0 0.0
    %432 = vmatpush1.msra.mxu0 %v203
    %433 = vmatprep.subr.mxu0 0.0
    %434 = vmatpush1.msra.mxu0 %v202
    %435 = vmatprep.subr.mxu0 0.0
    %436 = vmatpush1.msra.mxu0 %v201
    %437 = vmatprep.subr.mxu0 0.0
    %438 = vmatpush1.msra.mxu0 %v200
    %439 = vmatprep.subr.mxu0 0.0
    %440 = vmatpush1.msra.mxu0 %v199
    %441 = vmatprep.subr.mxu0 0.0
    %442 = vmatpush1.msra.mxu0 %v198
    %443 = vmatprep.subr.mxu0 0.0
    %444 = vmatpush1.msra.mxu0 %v197
    %445 = vmatprep.subr.mxu0 0.0
    %446 = vmatpush1.msra.mxu0 %v196
    %447 = vmatprep.subr.mxu0 0.0
    %448 = vmatpush1.msra.mxu0 %v195
    %449 = vmatprep.subr.mxu0 0.0
    %450 = vmatpush1.msra.mxu0 %v194
    %451 = vmatprep.subr.mxu0 0.0
    %452 = vmatpush1.msra.mxu0 %v193
    %453 = vmatprep.subr.mxu0 0.0
    %454 = vmatpush1.msra.mxu0 %v192
    %455 = vmatprep.subr.mxu0 0.0
    %456 = vmatpush1.msra.mxu0 %v191
    %457 = vmatprep.subr.mxu0 0.0
    %458 = vmatpush1.msra.mxu0 %v190
    %459 = vmatprep.subr.mxu0 0.0
    %460 = vmatpush2.msra.mxu0 0.0
    %461 = vmatprep.subr.mxu0 0.0
    %462 = vmatpush2.msra.mxu0 0.0
    %463 = vmatprep.subr.mxu0 0.0
    %464 = vmatpush2.msra.mxu0 0.0
    %465 = vmatprep.subr.mxu0 0.0
    %466 = vmatpush2.msra.mxu0 0.0
    %467 = vmatprep.subr.mxu0 0.0
    %468 = vmatpush2.msra.mxu0 0.0
    %469 = vmatprep.subr.mxu0 0.0
    %470 = vmatpush2.msra.mxu0 0.0
    %471 = vmatprep.subr.mxu0 0.0
    %472 = vmatpush2.msra.mxu0 0.0
    %473 = vmatprep.subr.mxu0 0.0
    %474 = vmatpush2.msra.mxu0 0.0
    %475 = vmatprep.subr.mxu0 0.0
    %476 = vmatpush2.msra.mxu0 0.0
    %477 = vmatprep.subr.mxu0 0.0
    %478 = vmatpush2.msra.mxu0 0.0
    %479 = vmatprep.subr.mxu0 0.0
    %480 = vmatpush2.msra.mxu0 0.0
    %481 = vmatprep.subr.mxu0 0.0
    %482 = vmatpush2.msra.mxu0 0.0
    %483 = vmatprep.subr.mxu0 0.0
    %484 = vmatpush2.msra.mxu0 0.0
    %485 = vmatprep.subr.mxu0 0.0
    %486 = vmatpush2.msra.mxu0 0.0
    %487 = vmatprep.subr.mxu0 0.0
    %488 = vmatpush2.msra.mxu0 0.0
    %489 = vmatprep.subr.mxu0 0.0
    %490 = vmatpush2.msra.mxu0 0.0
    %491 = vmatprep.mubr.f32.mxu0 0.0
    %492 = vmatmul.mubr.f32.gmra.mxu0 %v426
    %v493 = vpop.f32.mrf.mxu0
    %v494 = vadd.f32 %v167, %v493
    %v495 = vpop.f32.mrf.mxu0
    %496 = vdwg.mxu0
    %v497 = vtanh.pop %v494
    %v498 = vsub.f32 %v497, %v426
    %v499 = vmul.f32 %v56, %v498
    %v500 = vadd.f32 %v426, %v499
    %501 = vmatprep.subr.mxu0 0.0
    %502 = vmatpush1.msra.mxu0 %v205
    %503 = vmatprep.subr.mxu0 0.0
    %504 = vmatpush1.msra.mxu0 %v204
    %505 = vmatprep.subr.mxu0 0.0
    %506 = vmatpush1.msra.mxu0 %v203
    %507 = vmatprep.subr.mxu0 0.0
    %508 = vmatpush1.msra.mxu0 %v202
    %509 = vmatprep.subr.mxu0 0.0
    %510 = vmatpush1.msra.mxu0 %v201
    %511 = vmatprep.subr.mxu0 0.0
    %512 = vmatpush1.msra.mxu0 %v200
    %513 = vmatprep.subr.mxu0 0.0
    %514 = vmatpush1.msra.mxu0 %v199
    %515 = vmatprep.subr.mxu0 0.0
    %516 = vmatpush1.msra.mxu0 %v198
    %517 = vmatprep.subr.mxu0 0.0
    %518 = vmatpush1.msra.mxu0 %v197
    %519 = vmatprep.subr.mxu0 0.0
    %520 = vmatpush1.msra.mxu0 %v196
    %521 = vmatprep.subr.mxu0 0.0
    %522 = vmatpush1.msra.mxu0 %v195
    %523 = vmatprep.subr.mxu0 0.0
    %524 = vmatpush1.msra.mxu0 %v194
    %525 = vmatprep.subr.mxu0 0.0
    %526 = vmatpush1.msra.mxu0 %v193
    %527 = vmatprep.subr.mxu0 0.0
    %528 = vmatpush1.msra.mxu0 %v192
    %529 = vmatprep.subr.mxu0 0.0
    %530 = vmatpush1.msra.mxu0 %v191
    %531 = vmatprep.subr.mxu0 0.0
    %532 = vmatpush1.msra.mxu0 %v190
    %533 = vmatprep.subr.mxu0 0.0
    %534 = vmatpush2.msra.mxu0 0.0
    %535 = vmatprep.subr.mxu0 0.0
    %536 = vmatpush2.msra.mxu0 0.0
    %537 = vmatprep.subr.mxu0 0.0
    %538 = vmatpush2.msra.mxu0 0.0
    %539 = vmatprep.subr.mxu0 0.0
    %540 = vmatpush2.msra.mxu0 0.0
    %541 = vmatprep.subr.mxu0 0.0
    %542 = vmatpush2.msra.mxu0 0.0
    %543 = vmatprep.subr.mxu0 0.0
    %544 = vmatpush2.msra.mxu0 0.0
    %545 = vmatprep.subr.mxu0 0.0
    %546 = vmatpush2.msra.mxu0 0.0
    %547 = vmatprep.subr.mxu0 0.0
    %548 = vmatpush2.msra.mxu0 0.0
    %549 = vmatprep.subr.mxu0 0.0
    %550 = vmatpush2.msra.mxu0 0.0
    %551 = vmatprep.subr.mxu0 0.0
    %552 = vmatpush2.msra.mxu0 0.0
    %553 = vmatprep.subr.mxu0 0.0
    %554 = vmatpush2.msra.mxu0 0.0
    %555 = vmatprep.subr.mxu0 0.0
    %556 = vmatpush2.msra.mxu0 0.0
    %557 = vmatprep.subr.mxu0 0.0
    %558 = vmatpush2.msra.mxu0 0.0
    %559 = vmatprep.subr.mxu0 0.0
    %560 = vmatpush2.msra.mxu0 0.0
    %561 = vmatprep.subr.mxu0 0.0
    %562 = vmatpush2.msra.mxu0 0.0
    %563 = vmatprep.subr.mxu0 0.0
    %564 = vmatpush2.msra.mxu0 0.0
    %565 = vmatprep.mubr.f32.mxu0 0.0
    %566 = vmatmul.mubr.f32.gmra.mxu0 %v500
    %v567 = vpop.f32.mrf.mxu0
    %v568 = vadd.f32 %v172, %v567
    %v569 = vpop.f32.mrf.mxu0
    %570 = vdwg.mxu0
    %v571 = vtanh.pop %v568
    %v572 = vsub.f32 %v571, %v500
    %v573 = vmul.f32 %v56, %v572
    %v574 = vadd.f32 %v500, %v573
    %575 = vmatprep.subr.mxu0 0.0
    %576 = vmatpush1.msra.mxu0 %v205
    %577 = vmatprep.subr.mxu0 0.0
    %578 = vmatpush1.msra.mxu0 %v204
    %579 = vmatprep.subr.mxu0 0.0
    %580 = vmatpush1.msra.mxu0 %v203
    %581 = vmatprep.subr.mxu0 0.0
    %582 = vmatpush1.msra.mxu0 %v202
    %583 = vmatprep.subr.mxu0 0.0
    %584 = vmatpush1.msra.mxu0 %v201
    %585 = vmatprep.subr.mxu0 0.0
    %586 = vmatpush1.msra.mxu0 %v200
    %587 = vmatprep.subr.mxu0 0.0
    %588 = vmatpush1.msra.mxu0 %v199
    %589 = vmatprep.subr.mxu0 0.0
    %590 = vmatpush1.msra.mxu0 %v198
    %591 = vmatprep.subr.mxu0 0.0
    %592 = vmatpush1.msra.mxu0 %v197
    %593 = vmatprep.subr.mxu0 0.0
    %594 = vmatpush1.msra.mxu0 %v196
    %595 = vmatprep.subr.mxu0 0.0
    %596 = vmatpush1.msra.mxu0 %v195
    %597 = vmatprep.subr.mxu0 0.0
    %598 = vmatpush1.msra.mxu0 %v194
    %599 = vmatprep.subr.mxu0 0.0
    %600 = vmatpush1.msra.mxu0 %v193
    %601 = vmatprep.subr.mxu0 0.0
    %602 = vmatpush1.msra.mxu0 %v192
    %603 = vmatprep.subr.mxu0 0.0
    %604 = vmatpush1.msra.mxu0 %v191
    %605 = vmatprep.subr.mxu0 0.0
    %606 = vmatpush1.msra.mxu0 %v190
    %607 = vmatprep.subr.mxu0 0.0
    %608 = vmatpush2.msra.mxu0 0.0
    %609 = vmatprep.subr.mxu0 0.0
    %610 = vmatpush2.msra.mxu0 0.0
    %611 = vmatprep.subr.mxu0 0.0
    %612 = vmatpush2.msra.mxu0 0.0
    %613 = vmatprep.subr.mxu0 0.0
    %614 = vmatpush2.msra.mxu0 0.0
    %615 = vmatprep.subr.mxu0 0.0
    %616 = vmatpush2.msra.mxu0 0.0
    %617 = vmatprep.subr.mxu0 0.0
    %618 = vmatpush2.msra.mxu0 0.0
    %619 = vmatprep.subr.mxu0 0.0
    %620 = vmatpush2.msra.mxu0 0.0
    %621 = vmatprep.subr.mxu0 0.0
    %622 = vmatpush2.msra.mxu0 0.0
    %623 = vmatprep.subr.mxu0 0.0
    %624 = vmatpush2.msra.mxu0 0.0
    %625 = vmatprep.subr.mxu0 0.0
    %626 = vmatpush2.msra.mxu0 0.0
    %627 = vmatprep.subr.mxu0 0.0
    %628 = vmatpush2.msra.mxu0 0.0
    %629 = vmatprep.subr.mxu0 0.0
    %630 = vmatpush2.msra.mxu0 0.0
    %631 = vmatprep.subr.mxu0 0.0
    %632 = vmatpush2.msra.mxu0 0.0
    %633 = vmatprep.subr.mxu0 0.0
    %634 = vmatpush2.msra.mxu0 0.0
    %635 = vmatprep.subr.mxu0 0.0
    %636 = vmatpush2.msra.mxu0 0.0
    %637 = vmatprep.subr.mxu0 0.0
    %638 = vmatpush2.msra.mxu0 0.0
    %639 = vmatprep.mubr.f32.mxu0 0.0
    %640 = vmatmul.mubr.f32.gmra.mxu0 %v574
    %v641 = vpop.f32.mrf.mxu0
    %v642 = vadd.f32 %v177, %v641
    %v643 = vpop.f32.mrf.mxu0
    %644 = vdwg.mxu0
    %v645 = vtanh.pop %v642
    %v646 = vsub.f32 %v645, %v574
    %v647 = vmul.f32 %v56, %v646
    %v648 = vadd.f32 %v574, %v647
    %649 = vmatprep.subr.mxu0 0.0
    %650 = vmatpush1.msra.mxu0 %v205
    %651 = vmatprep.subr.mxu0 0.0
    %652 = vmatpush1.msra.mxu0 %v204
    %653 = vmatprep.subr.mxu0 0.0
    %654 = vmatpush1.msra.mxu0 %v203
    %655 = vmatprep.subr.mxu0 0.0
    %656 = vmatpush1.msra.mxu0 %v202
    %657 = vmatprep.subr.mxu0 0.0
    %658 = vmatpush1.msra.mxu0 %v201
    %659 = vmatprep.subr.mxu0 0.0
    %660 = vmatpush1.msra.mxu0 %v200
    %661 = vmatprep.subr.mxu0 0.0
    %662 = vmatpush1.msra.mxu0 %v199
    %663 = vmatprep.subr.mxu0 0.0
    %664 = vmatpush1.msra.mxu0 %v198
    %665 = vmatprep.subr.mxu0 0.0
    %666 = vmatpush1.msra.mxu0 %v197
    %667 = vmatprep.subr.mxu0 0.0
    %668 = vmatpush1.msra.mxu0 %v196
    %669 = vmatprep.subr.mxu0 0.0
    %670 = vmatpush1.msra.mxu0 %v195
    %671 = vmatprep.subr.mxu0 0.0
    %672 = vmatpush1.msra.mxu0 %v194
    %673 = vmatprep.subr.mxu0 0.0
    %674 = vmatpush1.msra.mxu0 %v193
    %675 = vmatprep.subr.mxu0 0.0
    %676 = vmatpush1.msra.mxu0 %v192
    %677 = vmatprep.subr.mxu0 0.0
    %678 = vmatpush1.msra.mxu0 %v191
    %679 = vmatprep.subr.mxu0 0.0
    %680 = vmatpush1.msra.mxu0 %v190
    %681 = vmatprep.subr.mxu0 0.0
    %682 = vmatpush2.msra.mxu0 0.0
    %683 = vmatprep.subr.mxu0 0.0
    %684 = vmatpush2.msra.mxu0 0.0
    %685 = vmatprep.subr.mxu0 0.0
    %686 = vmatpush2.msra.mxu0 0.0
    %687 = vmatprep.subr.mxu0 0.0
    %688 = vmatpush2.msra.mxu0 0.0
    %689 = vmatprep.subr.mxu0 0.0
    %690 = vmatpush2.msra.mxu0 0.0
    %691 = vmatprep.subr.mxu0 0.0
    %692 = vmatpush2.msra.mxu0 0.0
    %693 = vmatprep.subr.mxu0 0.0
    %694 = vmatpush2.msra.mxu0 0.0
    %695 = vmatprep.subr.mxu0 0.0
    %696 = vmatpush2.msra.mxu0 0.0
    %697 = vmatprep.subr.mxu0 0.0
    %698 = vmatpush2.msra.mxu0 0.0
    %699 = vmatprep.subr.mxu0 0.0
    %700 = vmatpush2.msra.mxu0 0.0
    %701 = vmatprep.subr.mxu0 0.0
    %702 = vmatpush2.msra.mxu0 0.0
    %703 = vmatprep.subr.mxu0 0.0
    %704 = vmatpush2.msra.mxu0 0.0
    %705 = vmatprep.subr.mxu0 0.0
    %706 = vmatpush2.msra.mxu0 0.0
    %707 = vmatprep.subr.mxu0 0.0
    %708 = vmatpush2.msra.mxu0 0.0
    %709 = vmatprep.subr.mxu0 0.0
    %710 = vmatpush2.msra.mxu0 0.0
    %711 = vmatprep.subr.mxu0 0.0
    %712 = vmatpush2.msra.mxu0 0.0
    %713 = vmatprep.mubr.f32.mxu0 0.0
    %714 = vmatmul.mubr.f32.gmra.mxu0 %v648
    %v715 = vpop.f32.mrf.mxu0
    %v716 = vadd.f32 %v182, %v715
    %v717 = vpop.f32.mrf.mxu0
    %718 = vdwg.mxu0
    %v719 = vtanh.pop %v716
    %v720 = vsub.f32 %v719, %v648
    %v721 = vmul.f32 %v56, %v720
    %v722 = vadd.f32 %v648, %v721
    %723 = vmatprep.subr.mxu0 0.0
    %724 = vmatpush1.msra.mxu0 %v205
    %725 = vmatprep.subr.mxu0 0.0
    %726 = vmatpush1.msra.mxu0 %v204
    %727 = vmatprep.subr.mxu0 0.0
    %728 = vmatpush1.msra.mxu0 %v203
    %729 = vmatprep.subr.mxu0 0.0
    %730 = vmatpush1.msra.mxu0 %v202
    %731 = vmatprep.subr.mxu0 0.0
    %732 = vmatpush1.msra.mxu0 %v201
    %733 = vmatprep.subr.mxu0 0.0
    %734 = vmatpush1.msra.mxu0 %v200
    %735 = vmatprep.subr.mxu0 0.0
    %736 = vmatpush1.msra.mxu0 %v199
    %737 = vmatprep.subr.mxu0 0.0
    %738 = vmatpush1.msra.mxu0 %v198
    %739 = vmatprep.subr.mxu0 0.0
    %740 = vmatpush1.msra.mxu0 %v197
    %741 = vmatprep.subr.mxu0 0.0
    %742 = vmatpush1.msra.mxu0 %v196
    %743 = vmatprep.subr.mxu0 0.0
    %744 = vmatpush1.msra.mxu0 %v195
    %745 = vmatprep.subr.mxu0 0.0
    %746 = vmatpush1.msra.mxu0 %v194
    %747 = vmatprep.subr.mxu0 0.0
    %748 = vmatpush1.msra.mxu0 %v193
    %749 = vmatprep.subr.mxu0 0.0
    %750 = vmatpush1.msra.mxu0 %v192
    %751 = vmatprep.subr.mxu0 0.0
    %752 = vmatpush1.msra.mxu0 %v191
    %753 = vmatprep.subr.mxu0 0.0
    %754 = vmatpush1.msra.mxu0 %v190
    %755 = vmatprep.subr.mxu0 0.0
    %756 = vmatpush2.msra.mxu0 0.0
    %757 = vmatprep.subr.mxu0 0.0
    %758 = vmatpush2.msra.mxu0 0.0
    %759 = vmatprep.subr.mxu0 0.0
    %760 = vmatpush2.msra.mxu0 0.0
    %761 = vmatprep.subr.mxu0 0.0
    %762 = vmatpush2.msra.mxu0 0.0
    %763 = vmatprep.subr.mxu0 0.0
    %764 = vmatpush2.msra.mxu0 0.0
    %765 = vmatprep.subr.mxu0 0.0
    %766 = vmatpush2.msra.mxu0 0.0
    %767 = vmatprep.subr.mxu0 0.0
    %768 = vmatpush2.msra.mxu0 0.0
    %769 = vmatprep.subr.mxu0 0.0
    %770 = vmatpush2.msra.mxu0 0.0
    %771 = vmatprep.subr.mxu0 0.0
    %772 = vmatpush2.msra.mxu0 0.0
    %773 = vmatprep.subr.mxu0 0.0
    %774 = vmatpush2.msra.mxu0 0.0
    %775 = vmatprep.subr.mxu0 0.0
    %776 = vmatpush2.msra.mxu0 0.0
    %777 = vmatprep.subr.mxu0 0.0
    %778 = vmatpush2.msra.mxu0 0.0
    %779 = vmatprep.subr.mxu0 0.0
    %780 = vmatpush2.msra.mxu0 0.0
    %781 = vmatprep.subr.mxu0 0.0
    %782 = vmatpush2.msra.mxu0 0.0
    %783 = vmatprep.subr.mxu0 0.0
    %784 = vmatpush2.msra.mxu0 0.0
    %785 = vmatprep.subr.mxu0 0.0
    %786 = vmatpush2.msra.mxu0 0.0
    %787 = vmatprep.mubr.f32.mxu0 0.0
    %788 = vmatmul.mubr.f32.gmra.mxu0 %v722
    %v789 = vpop.f32.mrf.mxu0
    %v790 = vadd.f32 %v187, %v789
    %v791 = vpop.f32.mrf.mxu0
    %792 = vdwg.mxu0
    %v793 = vtanh.pop %v790
    %v794 = vsub.f32 %v793, %v722
    %v795 = vmul.f32 %v56, %v794
    %v796 = vadd.f32 %v722, %v795
    %v797 = vld [vmem:[#allocation5 + $0x108] sm:$0xff]
    %v798 = vld [vmem:[#allocation5 + $0x110] sm:$0xff]
    %v799 = vld [vmem:[#allocation5 + $0x118] sm:$0xff]
    %v800 = vld [vmem:[#allocation5 + $0x120] sm:$0xff]
    %v801 = vld [vmem:[#allocation5 + $0x128] sm:$0xff]
    %v802 = vld [vmem:[#allocation5 + $0x130] sm:$0xff]
    %v803 = vld [vmem:[#allocation5 + $0x138] sm:$0xff]
    %v804 = vld [vmem:[#allocation5 + $0x140] sm:$0xff]
    %v805 = vld [vmem:[#allocation5 + $0x148] sm:$0xff]
    %v806 = vld [vmem:[#allocation5 + $0x150] sm:$0xff]
    %v807 = vld [vmem:[#allocation5 + $0x158] sm:$0xff]
    %v808 = vld [vmem:[#allocation5 + $0x160] sm:$0xff]
    %v809 = vld [vmem:[#allocation5 + $0x168] sm:$0xff]
    %v810 = vld [vmem:[#allocation5 + $0x170] sm:$0xff]
    %v811 = vld [vmem:[#allocation5 + $0x178] sm:$0xff]
    %v812 = vld [vmem:[#allocation5 + $0x180] sm:$0xff]
    %v813 = vlaneseq
    %v814 = vshrl.u32 %v813, 7
    %v815 = vsub.s32 2, %v814
    %v816 = vrot.slane %v40, %v815
    %817 = vmatprep.subr.mxu0 0.0
    %818 = vmatpush1.msra.mxu0 %v812
    %819 = vmatprep.subr.mxu0 0.0
    %820 = vmatpush1.msra.mxu0 %v811
    %821 = vmatprep.subr.mxu0 0.0
    %822 = vmatpush1.msra.mxu0 %v810
    %823 = vmatprep.subr.mxu0 0.0
    %824 = vmatpush1.msra.mxu0 %v809
    %825 = vmatprep.subr.mxu0 0.0
    %826 = vmatpush1.msra.mxu0 %v808
    %827 = vmatprep.subr.mxu0 0.0
    %828 = vmatpush1.msra.mxu0 %v807
    %829 = vmatprep.subr.mxu0 0.0
    %830 = vmatpush1.msra.mxu0 %v806
    %831 = vmatprep.subr.mxu0 0.0
    %832 = vmatpush1.msra.mxu0 %v805
    %833 = vmatprep.subr.mxu0 0.0
    %834 = vmatpush1.msra.mxu0 %v804
    %835 = vmatprep.subr.mxu0 0.0
    %836 = vmatpush1.msra.mxu0 %v803
    %837 = vmatprep.subr.mxu0 0.0
    %838 = vmatpush1.msra.mxu0 %v802
    %839 = vmatprep.subr.mxu0 0.0
    %840 = vmatpush1.msra.mxu0 %v801
    %841 = vmatprep.subr.mxu0 0.0
    %842 = vmatpush1.msra.mxu0 %v800
    %843 = vmatprep.subr.mxu0 0.0
    %844 = vmatpush1.msra.mxu0 %v799
    %845 = vmatprep.subr.mxu0 0.0
    %846 = vmatpush1.msra.mxu0 %v798
    %847 = vmatprep.subr.mxu0 0.0
    %848 = vmatpush1.msra.mxu0 %v797
    %849 = vmatprep.subr.mxu0 0.0
    %850 = vmatpush2.msra.mxu0 0.0
    %851 = vmatprep.subr.mxu0 0.0
    %852 = vmatpush2.msra.mxu0 0.0
    %853 = vmatprep.subr.mxu0 0.0
    %854 = vmatpush2.msra.mxu0 0.0
    %855 = vmatprep.subr.mxu0 0.0
    %856 = vmatpush2.msra.mxu0 0.0
    %857 = vmatprep.subr.mxu0 0.0
    %858 = vmatpush2.msra.mxu0 0.0
    %859 = vmatprep.subr.mxu0 0.0
    %860 = vmatpush2.msra.mxu0 0.0
    %861 = vmatprep.subr.mxu0 0.0
    %862 = vmatpush2.msra.mxu0 0.0
    %863 = vmatprep.subr.mxu0 0.0
    %864 = vmatpush2.msra.mxu0 0.0
    %865 = vmatprep.subr.mxu0 0.0
    %866 = vmatpush2.msra.mxu0 0.0
    %867 = vmatprep.subr.mxu0 0.0
    %868 = vmatpush2.msra.mxu0 0.0
    %869 = vmatprep.subr.mxu0 0.0
    %870 = vmatpush2.msra.mxu0 0.0
    %871 = vmatprep.subr.mxu0 0.0
    %872 = vmatpush2.msra.mxu0 0.0
    %873 = vmatprep.subr.mxu0 0.0
    %874 = vmatpush2.msra.mxu0 0.0
    %875 = vmatprep.subr.mxu0 0.0
    %876 = vmatpush2.msra.mxu0 0.0
    %877 = vmatprep.subr.mxu0 0.0
    %878 = vmatpush2.msra.mxu0 0.0
    %879 = vmatprep.subr.mxu0 0.0
    %880 = vmatpush2.msra.mxu0 0.0
    %881 = vmatprep.mubr.f32.mxu0 0.0
    %882 = vmatmul.mubr.f32.gmra.mxu0 %v796
    %v883 = vpop.f32.mrf.mxu0
    %v884 = vadd.f32 %v816, %v883
    %v885 = vpop.f32.mrf.mxu0
    %886 = vdwg.mxu0
    %887 = vst [vmem:[#allocation7] sm:$0xff] %v884
    // Predicated region
    $region18: #{tpu_custom_call.1} parent=1 // pred_check
      _
    $region19: #{tpu_custom_call.1} parent=1 // pred_check_branch
      %889 = sbr.rel (0) target = $region21
    $region20: #{tpu_custom_call.1} parent=1 // pred_region
      %s891 = ssub.s32 128, 128
      %892 = vsyncadd [#allocation4], %s891
      %s894 = sshll.u32 [#allocation7], 4
      %s895 = int_to_ptr.vmem [resolvable:$true] %s894
      %897 = dma.vmem_to_hbm [thread:$0]  %s895, 128, %s2, [#allocation4]
    $region21: #{tpu_custom_call.1} parent=1 // pred_fallthru
      _
    // Predicated region
    $region22: #{tpu_custom_call.1} parent=1 // pred_check
      _
    $region23: #{tpu_custom_call.1} parent=1 // pred_check_branch
      %899 = sbr.rel (0) target = $region25
    $region24: #{tpu_custom_call.1} parent=1 // pred_region
      %900 = dma.done [#allocation4], 128
    $region25: #{tpu_custom_call.1} parent=1 // pred_fallthru
      _
    %901 = vsyncpa [#allocation3], 1
    %902 = vsyncpa [#allocation6], 1
    %903 = vsyncpa [#allocation4], 1

</llo_original>
